<compile_context>
chip_gen: v5e
topology: v5e:2x2
jax: 0.10.0
libtpu: 0.0.40
codegen_flags: <defaults>
</compile_context>

<pallas_src>
import functools

import jax
import jax.numpy as jnp
from jax.experimental import pallas as pl
from jax.experimental.pallas import tpu as pltpu


def _round_up(n: int, m: int) -> int:
    return ((n + m - 1) // m) * m


def _round_down(n: int, m: int) -> int:
    return (n // m) * m


def _gap_kernel(x_ref, o_ref, *, inv_hw: float):
    # x_ref block: (TILE_R, HW); o_ref block: (TILE_R, 1)
    # Upcast is fused into the reduce (no separate f32 copy of the tile).
    s = jnp.sum(x_ref[...], axis=-1, keepdims=True, dtype=jnp.float32)
    o_ref[...] = (s * inv_hw).astype(o_ref.dtype)


def global_avg_pool2d(x, *, max_block_bytes: int = 4 * 1024 * 1024):
    """Pallas equivalent of F.avg_pool2d(x, kernel_size=x.shape[2:])."""
    N, C, H, W = x.shape
    HW = H * W
    R = N * C
    inv_hw = 1.0 / float(HW)

    # Flatten so the reduction axis (H*W) is the lane axis.
    x2 = x.reshape(R, HW)
    itemsize = x2.dtype.itemsize

    # Sublane alignment for the row-tile: 8 for 4-byte, 16 for 2-byte,
    # 32 for 1-byte dtypes.
    sub = 8 * (4 // max(1, itemsize))

    # Row tile: big enough (~max_block_bytes) to amortize per-step overhead,
    # small enough that double-buffered blocks fit scoped VMEM on all
    # generations (v7x has only 64 MiB physical VMEM).
    rows_per_block = max_block_bytes // max(1, HW * itemsize)
    tile_r = min(_round_up(R, sub), max(sub, _round_down(rows_per_block, sub)))

    num_tiles = pl.cdiv(R, tile_r)
    out_rows = num_tiles * tile_r  # >= R; padded rows are sliced off below.

    out2 = pl.pallas_call(
        functools.partial(_gap_kernel, inv_hw=inv_hw),
        out_shape=jax.ShapeDtypeStruct((out_rows, 1), x.dtype),
        grid_spec=pltpu.PrefetchScalarGridSpec(
            num_scalar_prefetch=0,
            grid=(num_tiles,),
            in_specs=[pl.BlockSpec((tile_r, HW), lambda i: (i, 0))],
            out_specs=pl.BlockSpec((tile_r, 1), lambda i: (i, 0)),
        ),
        compiler_params=pltpu.CompilerParams(
            dimension_semantics=("parallel",),
        ),
    )(x2)

    return out2[:R].reshape(N, C, 1, 1)


if __name__ == "__main__":
    key = jax.random.PRNGKey(0)
    # Shapes consistent with a NIN-style feature map: (N, C, H, W)
    x = jax.random.normal(key, (2, 4, 16, 16), dtype=jnp.float32)

    out = global_avg_pool2d(x)
    out = jax.block_until_ready(out)

    # Reference check (plain JAX): mean over spatial dims, keep dims.
    ref = jnp.mean(x, axis=(2, 3), keepdims=True)
    assert out.shape == (2, 4, 1, 1), out.shape
    assert out.dtype == x.dtype, out.dtype
    assert jnp.allclose(out, ref, atol=1e-5, rtol=1e-5), "mismatch vs reference"

    print("KERNEL_OK")
</pallas_src>

<mosaic_0001>
module attributes {stable_mosaic.version = 11 : i64} {
  func.func @_gap_kernel(%arg0: i32, %arg1: memref<8x256xf32, #tpu.memory_space<vmem>>, %arg2: memref<8x1xf32, #tpu.memory_space<vmem>>) attributes {dimension_semantics = [#tpu.dimension_semantics<parallel>], iteration_bounds = array<i64: 1>, scalar_prefetch = 0 : i64, scratch_operands = 0 : i64, tpu.core_type = #tpu.core_type<tc>, window_params = [{transform_indices = @transform_0, window_bounds = array<i64: 8, 256>}, {transform_indices = @transform_1, window_bounds = array<i64: 8, 1>}]} {
    %c0 = arith.constant 0 : index
    %c0_0 = arith.constant 0 : index
    %0 = vector.load %arg1[%c0, %c0_0] : memref<8x256xf32, #tpu.memory_space<vmem>>, vector<8x256xf32>
    %cst = arith.constant dense<0.000000e+00> : vector<8xf32>
    %1 = vector.multi_reduction <add>, %0, %cst [1] : vector<8x256xf32> to vector<8xf32>
    %2 = vector.shape_cast %1 : vector<8xf32> to vector<8x1xf32>
    %cst_1 = arith.constant 3.906250e-03 : f32
    %3 = vector.broadcast %cst_1 : f32 to vector<8x1xf32>
    %4 = arith.mulf %2, %3 : vector<8x1xf32>
    %c0_2 = arith.constant 0 : index
    %c0_3 = arith.constant 0 : index
    %5 = vector.load %arg2[%c0_2, %c0_3] : memref<8x1xf32, #tpu.memory_space<vmem>>, vector<8x1xf32>
    tpu.vector_store %arg2[%c0_2, %c0_3], %4 {strides = array<i32>} : memref<8x1xf32, #tpu.memory_space<vmem>>, vector<8x1xf32>,
    return
  }
  func.func @transform_0(%arg0: i32) -> (i32, i32) {
    %c0_i32 = arith.constant 0 : i32
    %c0_i32_0 = arith.constant 0 : i32
    return %arg0, %c0_i32 : i32, i32
  }
  func.func @transform_1(%arg0: i32) -> (i32, i32) {
    %c0_i32 = arith.constant 0 : i32
    %c0_i32_0 = arith.constant 0 : i32
    return %arg0, %c0_i32 : i32, i32
  }
}

</mosaic_0001>

<llo_original>
// kernel: tpu_custom_call.1
$region0: #{tpu_custom_call.1}
  #allocation0 [shape = 'u32[]', space=smem, size = 0x4, offset = 0x4, fixed_abs, tag = 'smem constant byte address 0x4 - core index']
  #allocation1 [shape = 'u32[72,128]{1,0:T(1,128)}', space=vmem, size = 0x9000, scoped, tag = 'internal scratch']
  %s0 = inlined_call_operand.hbm [shape: f32[8,256], index: 0, kind: input, shape index: {}]
  %s1 = inlined_call_operand.vmem [shape: f32[8,1], index: 1, kind: output, shape index: {}]
  %s2 = sld [smem:[#allocation0]]
  $region18: #{tpu_custom_call.1} parent=0
    _
  %s4 = ssub.s32 1, %s2
  %s5 = scalar_select 0, %s4, %s2
  $region1: #{tpu_custom_call.1} parent=0
    #allocation2 [shape = 'u8[8192]{0}', space=vmem, size = 0x2000, scoped, tag = 'input window, operand 0, single buffered']
    #allocation3 [shape = 's32[1]{0}', space=sflag, size = 0x4, scoped, tag = 'scoped memory for tpu_custom_call.1']
    %6 = vsyncpa [#allocation3], 0
    // Predicated region
    $region2: #{tpu_custom_call.1} parent=1 // pred_check
      _
    $region3: #{tpu_custom_call.1} parent=1 // pred_check_branch
      %8 = sbr.rel (0) target = $region5
    $region4: #{tpu_custom_call.1} parent=1 // pred_region
      %10 = vsyncadd [#allocation3], 0
      %s12 = sshll.u32 %s0, 4
      %s13 = int_to_ptr.hbm [resolvable:$true] %s12
      %s14 = sshll.u32 [#allocation2], 4
      %s15 = int_to_ptr.vmem [resolvable:$true] %s14
      %17 = dma.hbm_to_vmem [thread:$0]  %s13, 256, %s15, [#allocation3]
    $region5: #{tpu_custom_call.1} parent=1 // pred_fallthru
      _
    // Predicated region
    $region6: #{tpu_custom_call.1} parent=1 // pred_check
      _
    $region7: #{tpu_custom_call.1} parent=1 // pred_check_branch
      %19 = sbr.rel (0) target = $region9
    $region8: #{tpu_custom_call.1} parent=1 // pred_region
      %21 = dma.done [#allocation3], 256
    $region9: #{tpu_custom_call.1} parent=1 // pred_fallthru
      _
    %v22 = vld [vmem:[#allocation2] sm:$0xff]
    %v23 = vld [vmem:[#allocation2 + $0x8] sm:$0xff]
    %v24 = vadd.f32 %v22, %v23
    %25 = vadd.xlane.f32.xlu0 %v24
    %v26 = vpop.xlane.xlu0 %25
    %v27 = vmul.f32 %v26, 0.00390625
    %vm28 = vcmask 7168
    %29 = vst.msk [vmem:[%s1] sm:$0xff] %vm28, %v27
    // Predicated region
    $region10: #{tpu_custom_call.1} parent=1 // pred_check
      _
    $region11: #{tpu_custom_call.1} parent=1 // pred_check_branch
      %31 = sbr.rel (0) target = $region13
    $region12: #{tpu_custom_call.1} parent=1 // pred_region
      _
    $region13: #{tpu_custom_call.1} parent=1 // pred_fallthru
      _
    // Predicated region
    $region14: #{tpu_custom_call.1} parent=1 // pred_check
      _
    $region15: #{tpu_custom_call.1} parent=1 // pred_check_branch
      %33 = sbr.rel (0) target = $region17
    $region16: #{tpu_custom_call.1} parent=1 // pred_region
      _
    $region17: #{tpu_custom_call.1} parent=1 // pred_fallthru
      _
    %34 = vsyncpa [#allocation3], 1

</llo_original>
